<compile_context>
chip_gen: v5e
topology: v5e:2x2
jax: 0.10.0
libtpu: 0.0.40
codegen_flags: <defaults>
</compile_context>

<pallas_src>
import jax
import jax.numpy as jnp
from jax.experimental import pallas as pl
from jax.experimental.pallas import tpu as pltpu


def _round_up(v: int, m: int) -> int:
    return ((v + m - 1) // m) * m


def _make_gconv_kernel(compute_dtype):
    def _gconv_kernel(x_ref, a_ref, o_ref):
        # x_ref : (TM, P_in)  input tile in its original dtype (no HBM copy)
        # a_ref : (P_in, C)   fused (polyn^T @ W^T), resident across tiles
        # o_ref : (TM, C)     f32 output tile (unpadded, no post-slice needed)
        x = x_ref[...].astype(compute_dtype)   # in-kernel cast: VPU, ~free
        a = a_ref[...].astype(compute_dtype)   # no-op if dtype already matches
        o_ref[...] = jnp.dot(x, a, preferred_element_type=jnp.float32).astype(
            o_ref.dtype)
    return _gconv_kernel


def graph_convolution_forward(x, polyn_item, weight, *, tm=2048,
                              compute_dtype=jnp.bfloat16):
    """Pallas TPU implementation of GraphConvolution.forward.

    x          : (..., in_chan)     float
    polyn_item : (P_out, in_chan)   graph-polynomial term (square for DGCNN)
    weight     : (out_chan, P_out)  nn.Linear weight, no bias
    returns    : (..., out_chan)    float32
    """
    P_out, P_in = polyn_item.shape
    C, C_in = weight.shape
    assert x.shape[-1] == P_in, "x last dim must match polyn_item in dim"
    assert C_in == P_out, "linear in_chan must match polyn_item out dim"

    lead_shape = x.shape[:-1]
    BM = 1
    for d in lead_shape:
        BM *= d

    # --- exact algebraic fusion:  (x @ P^T) @ W^T == x @ (P^T @ W^T) --------
    # Tiny O(N^2*C) matmul in plain JAX (f32); the heavy O(BM*N*C) GEMM stays
    # in the Pallas kernel.
    A = (polyn_item.T.astype(jnp.float32)
         @ weight.T.astype(jnp.float32)).astype(compute_dtype)   # (P_in, C)

    x2 = x.reshape(BM, P_in)   # metadata reshape only; NO pad, NO cast, NO copy

    # --- tile-size selection under a conservative VMEM budget ---------------
    x_bytes = jnp.dtype(x2.dtype).itemsize
    cd_bytes = jnp.dtype(compute_dtype).itemsize
    out_bytes = jnp.dtype(jnp.float32).itemsize
    sub = 16                                        # sublane-safe row multiple
    TM = min(_round_up(tm, sub), _round_up(BM, sub))

    def _vmem_budget(tm_):
        return (2 * tm_ * P_in * x_bytes            # x tiles  (double-buffered)
                + 2 * P_in * C * cd_bytes           # fused A  (double-buffered)
                + 2 * tm_ * C * out_bytes)          # out tiles (double-buffered)

    VMEM_CAP = 10 * 1024 * 1024   # conservative vs v5e's 16 MiB scoped default
    while _vmem_budget(TM) > VMEM_CAP and TM > sub:
        TM = max(sub, _round_up(TM // 2, sub))

    grid = (pl.cdiv(BM, TM),)     # ragged last tile handled by Pallas masking

    out = pl.pallas_call(
        _make_gconv_kernel(compute_dtype),
        out_shape=jax.ShapeDtypeStruct((BM, C), jnp.float32),
        grid_spec=pltpu.PrefetchScalarGridSpec(
            num_scalar_prefetch=0,
            grid=grid,
            in_specs=[
                # x tile: last dim = full array dim (unpadded contraction)
                pl.BlockSpec((TM, P_in), lambda i: (i, 0)),
                # fused A: whole matrix, constant index -> DMA'd once
                pl.BlockSpec((P_in, C), lambda i: (0, 0)),
            ],
            out_specs=pl.BlockSpec((TM, C), lambda i: (i, 0)),
        ),
        compiler_params=pltpu.CompilerParams(
            # BM tiles are independent -> shard across both TCs on v7x.
            dimension_semantics=("parallel",),
            vmem_limit_bytes=32 * 1024 * 1024),
        cost_estimate=pl.CostEstimate(
            flops=2 * BM * P_in * C,
            transcendentals=0,
            bytes_accessed=(BM * P_in * x_bytes
                            + P_in * C * cd_bytes
                            + BM * C * out_bytes)),
    )(x2, A)

    return out.reshape(*lead_shape, C)


def graph_convolution_reference(x, polyn_item, weight):
    """Pure-JAX reference matching the PyTorch forward exactly (f32)."""
    h = jnp.einsum("...i,pi->...p", x.astype(jnp.float32),
                   polyn_item.astype(jnp.float32))          # F.linear(x, polyn)
    return jnp.einsum("...p,op->...o", h,
                      weight.astype(jnp.float32))           # nn.Linear (no bias)


if __name__ == "__main__":
    # Small deterministic setup: B=2, M=8 rows per sample, in_chan = N = 16
    # graph nodes, out_chan = 32.
    B, M, N, OUT = 2, 8, 16, 32

    key = jax.random.PRNGKey(0)
    kx, kp, kw = jax.random.split(key, 3)

    x = jax.random.normal(kx, (B, M, N), dtype=jnp.float32)
    polyn = 0.1 * jax.random.normal(kp, (N, N), dtype=jnp.float32)     # polyn_item
    weight = 0.1 * jax.random.normal(kw, (OUT, N), dtype=jnp.float32)  # (out, in)

    ref = graph_convolution_reference(x, polyn, weight)

    # Default fast path: bf16 MXU compute with f32 accumulation.
    out = jax.block_until_ready(graph_convolution_forward(x, polyn, weight))
    assert out.shape == (B, M, OUT)
    err_bf16 = float(jnp.max(jnp.abs(out - ref)))
    assert jnp.allclose(out, ref, atol=2e-2, rtol=2e-2), f"bf16 mismatch: {err_bf16}"

    # f32 parity path (matches the PyTorch f32 forward tightly).
    out_f32 = jax.block_until_ready(
        graph_convolution_forward(x, polyn, weight, compute_dtype=jnp.float32))
    err_f32 = float(jnp.max(jnp.abs(out_f32 - ref)))
    assert jnp.allclose(out_f32, ref, atol=1e-3, rtol=1e-3), f"f32 mismatch: {err_f32}"

    print("KERNEL_OK")
</pallas_src>

<mosaic_0001>
module attributes {stable_mosaic.version = 11 : i64} {
  func.func @_gconv_kernel(%arg0: i32, %arg1: memref<16x16xf32, #tpu.memory_space<vmem>>, %arg2: memref<16x32xbf16, #tpu.memory_space<vmem>>, %arg3: memref<16x32xf32, #tpu.memory_space<vmem>>) attributes {dimension_semantics = [#tpu.dimension_semantics<parallel>], iteration_bounds = array<i64: 1>, scalar_prefetch = 0 : i64, scratch_operands = 0 : i64, tpu.core_type = #tpu.core_type<tc>, window_params = [{transform_indices = @transform_0, window_bounds = array<i64: 16, 16>}, {pipeline_mode = #tpu.pipeline_mode<synchronous>, transform_indices = @transform_1, window_bounds = array<i64: 16, 32>}, {transform_indices = @transform_2, window_bounds = array<i64: 16, 32>}]} {
    %c0 = arith.constant 0 : index
    %c0_0 = arith.constant 0 : index
    %0 = vector.load %arg1[%c0, %c0_0] : memref<16x16xf32, #tpu.memory_space<vmem>>, vector<16x16xf32>
    %1 = arith.truncf %0 : vector<16x16xf32> to vector<16x16xbf16>
    %c0_1 = arith.constant 0 : index
    %c0_2 = arith.constant 0 : index
    %2 = vector.load %arg2[%c0_1, %c0_2] : memref<16x32xbf16, #tpu.memory_space<vmem>>, vector<16x32xbf16>
    %cst = arith.constant dense<0.000000e+00> : vector<16x32xf32>
    %3 = tpu.matmul %1, %2, %cst {dimension_numbers = #tpu.dot_dimension_numbers<[1], [0], [0], [1], [0, 0, 1, 1], [], []>} : vector<16x16xbf16>, vector<16x32xbf16>, vector<16x32xf32> -> vector<16x32xf32>
    %c0_3 = arith.constant 0 : index
    %c0_4 = arith.constant 0 : index
    %4 = vector.load %arg3[%c0_3, %c0_4] : memref<16x32xf32, #tpu.memory_space<vmem>>, vector<16x32xf32>
    tpu.vector_store %arg3[%c0_3, %c0_4], %3 {strides = array<i32>} : memref<16x32xf32, #tpu.memory_space<vmem>>, vector<16x32xf32>,
    return
  }
  func.func @transform_0(%arg0: i32) -> (i32, i32) {
    %c0_i32 = arith.constant 0 : i32
    %c0_i32_0 = arith.constant 0 : i32
    return %arg0, %c0_i32 : i32, i32
  }
  func.func @transform_1(%arg0: i32) -> (i32, i32) {
    %c0_i32 = arith.constant 0 : i32
    %c0_i32_0 = arith.constant 0 : i32
    %c0_i32_1 = arith.constant 0 : i32
    return %c0_i32, %c0_i32_0 : i32, i32
  }
  func.func @transform_2(%arg0: i32) -> (i32, i32) {
    %c0_i32 = arith.constant 0 : i32
    %c0_i32_0 = arith.constant 0 : i32
    return %arg0, %c0_i32 : i32, i32
  }
}

</mosaic_0001>

<llo_original>
// kernel: tpu_custom_call.1
$region0: #{tpu_custom_call.1}
  #allocation0 [shape = 'u32[]', space=smem, size = 0x4, offset = 0x4, fixed_abs, tag = 'smem constant byte address 0x4 - core index']
  #allocation1 [shape = 'u32[72,128]{1,0:T(1,128)}', space=vmem, size = 0x9000, scoped, tag = 'internal scratch']
  %s0 = inlined_call_operand.hbm [shape: f32[16,16], index: 0, kind: input, shape index: {}]
  %s1 = inlined_call_operand.hbm [shape: bf16[16,32], index: 1, kind: input, shape index: {}]
  %s2 = inlined_call_operand.hbm [shape: f32[16,32], index: 2, kind: output, shape index: {}]
  %s3 = sld [smem:[#allocation0]]
  $region26: #{tpu_custom_call.1} parent=0
    _
  %s5 = ssub.s32 1, %s3
  %s6 = scalar_select 0, %s5, %s3
  $region1: #{tpu_custom_call.1} parent=0
    #allocation2 [shape = 'u8[8192]{0}', space=vmem, size = 0x2000, scoped, tag = 'input window, operand 0, single buffered']
    #allocation3 [shape = 's32[1]{0}', space=sflag, size = 0x4, scoped, tag = 'scoped memory for tpu_custom_call.1']
    #allocation4 [shape = 's32[1]{0}', space=sflag, size = 0x4, scoped, tag = 'scoped memory for tpu_custom_call.1']
    #allocation5 [shape = 'u8[4096]{0}', space=vmem, size = 0x1000, scoped, tag = 'input window, operand 1, single buffered']
    #allocation6 [shape = 's32[1]{0}', space=sflag, size = 0x4, scoped, tag = 'scoped memory for tpu_custom_call.1']
    #allocation7 [shape = 'u8[8192]{0}', space=vmem, size = 0x2000, scoped, tag = 'output window, operand 0, single buffered']
    %7 = vsyncpa [#allocation3], 0
    %8 = vsyncpa [#allocation6], 0
    %9 = vsyncpa [#allocation4], 0
    // Predicated region
    $region2: #{tpu_custom_call.1} parent=1 // pred_check
      _
    $region3: #{tpu_custom_call.1} parent=1 // pred_check_branch
      %11 = sbr.rel (0) target = $region5
    $region4: #{tpu_custom_call.1} parent=1 // pred_region
      %13 = vsyncadd [#allocation3], 0
      %s14 = sshll.u32 %s0, 4
      %s15 = int_to_ptr.hbm [resolvable:$true] %s14
      %s16 = sshll.u32 [#allocation2], 4
      %s17 = int_to_ptr.vmem [resolvable:$true] %s16
      %22 = dma.hbm_to_vmem [thread:$0]  %s15, 256, %s17, [#allocation3], 128, 128, 8
    $region5: #{tpu_custom_call.1} parent=1 // pred_fallthru
      _
    // Predicated region
    $region6: #{tpu_custom_call.1} parent=1 // pred_check
      _
    $region7: #{tpu_custom_call.1} parent=1 // pred_check_branch
      %24 = sbr.rel (0) target = $region9
    $region8: #{tpu_custom_call.1} parent=1 // pred_region
      %26 = vsyncadd [#allocation6], 0
      %s27 = sshll.u32 %s1, 4
      %s28 = int_to_ptr.hbm [resolvable:$true] %s27
      %s29 = sshll.u32 [#allocation5], 4
      %s30 = int_to_ptr.vmem [resolvable:$true] %s29
      %35 = dma.hbm_to_vmem [thread:$0]  %s28, 128, %s30, [#allocation6], 64, 64, 4
    $region9: #{tpu_custom_call.1} parent=1 // pred_fallthru
      _
    // Predicated region
    $region10: #{tpu_custom_call.1} parent=1 // pred_check
      _
    $region11: #{tpu_custom_call.1} parent=1 // pred_check_branch
      %37 = sbr.rel (0) target = $region13
    $region12: #{tpu_custom_call.1} parent=1 // pred_region
      %39 = dma.done [#allocation3], 256
    $region13: #{tpu_custom_call.1} parent=1 // pred_fallthru
      _
    // Predicated region
    $region14: #{tpu_custom_call.1} parent=1 // pred_check
      _
    $region15: #{tpu_custom_call.1} parent=1 // pred_check_branch
      %41 = sbr.rel (0) target = $region17
    $region16: #{tpu_custom_call.1} parent=1 // pred_region
      %43 = dma.done [#allocation6], 128
    $region17: #{tpu_custom_call.1} parent=1 // pred_fallthru
      _
    %v45 = vld [vmem:[#allocation2] sm:$0xff]
    %v46 = vld [vmem:[#allocation2 + $0x8] sm:$0xff]
    %v47 = vpack.c.bf16 %v46, %v45
    %v48 = vld [vmem:[#allocation5] sm:$0xf]
    %v49 = vld [vmem:[#allocation5 + $0x4] sm:$0xf]
    %v52 = vunpack.c.l.b16 %v48
    %v53 = vunpack.c.l.b16 %v49
    %v54 = vpack.c.b16 %v53, %v52
    %vm56 = vcmask 130048
    %v58 = vsel %vm56, %v47, 0
    %60 = vmatpush.bf16.msra.mxu0 0
    %61 = vmatpush.bf16.msra.mxu0 0
    %62 = vmatpush.bf16.msra.mxu0 0
    %63 = vmatpush.bf16.msra.mxu0 0
    %64 = vmatpush.bf16.msra.mxu0 0
    %65 = vmatpush.bf16.msra.mxu0 0
    %66 = vmatpush.bf16.msra.mxu0 0
    %67 = vmatpush.bf16.msra.mxu0 %v54
    %68 = vmatmul.bf16.gmra.mxu0 %v58
    %v69 = vpop.f32.mrf.mxu0
    %v70 = vadd.f32 0.0, %v69
    %v71 = vpop.f32.mrf.mxu0
    %v72 = vadd.f32 0.0, %v71
    %73 = vdwg.mxu0
    %vm74 = vcmask 261120
    %75 = vst.msk [vmem:[#allocation7] sm:$0xff] %vm74, %v70
    %76 = vst.msk [vmem:[#allocation7 + $0x8] sm:$0xff] %vm74, %v72
    // Predicated region
    $region18: #{tpu_custom_call.1} parent=1 // pred_check
      _
    $region19: #{tpu_custom_call.1} parent=1 // pred_check_branch
      %78 = sbr.rel (0) target = $region21
    $region20: #{tpu_custom_call.1} parent=1 // pred_region
      %80 = vsyncadd [#allocation4], 0
      %s81 = sshll.u32 [#allocation7], 4
      %s82 = int_to_ptr.vmem [resolvable:$true] %s81
      %s83 = sshll.u32 %s2, 4
      %s84 = int_to_ptr.hbm [resolvable:$true] %s83
      %89 = dma.vmem_to_hbm [thread:$0]  %s82, 256, %s84, [#allocation4], 128, 128, 8
    $region21: #{tpu_custom_call.1} parent=1 // pred_fallthru
      _
    // Predicated region
    $region22: #{tpu_custom_call.1} parent=1 // pred_check
      _
    $region23: #{tpu_custom_call.1} parent=1 // pred_check_branch
      %91 = sbr.rel (0) target = $region25
    $region24: #{tpu_custom_call.1} parent=1 // pred_region
      %93 = dma.done [#allocation4], 256
    $region25: #{tpu_custom_call.1} parent=1 // pred_fallthru
      _
    %94 = vsyncpa [#allocation3], 1
    %95 = vsyncpa [#allocation6], 1
    %96 = vsyncpa [#allocation4], 1

</llo_original>
